<compile_context>
chip_gen: v6e
topology: v6e:2x2x1
jax: 0.10.0
libtpu: 0.0.40
codegen_flags: <defaults>
</compile_context>

<pallas_src>
import functools

import jax
import jax.numpy as jnp
from jax.experimental import pallas as pl
from jax.experimental.pallas import tpu as pltpu


def _round_up(x, m):
    return ((x + m - 1) // m) * m


def _cdiv(a, b):
    return -(-a // b)


def _segment_pool_kernel(batch_ref, x_ref, sums_ref, cnts_ref, acc_ref,
                         cnt_ref, *, transposed, tiles_per_split, tile_nodes,
                         num_nodes):
    """Accumulate per-graph feature sums (and node counts) over node tiles.

    batch_ref : (1, TN)          int32  graph id per node (-1 = padding)
    x_ref     : (F, TN)|(TN, F)  float  node-feature tile
    sums_ref  : (B_pad, F)       f32    per-split pooled sums (written once)
    cnts_ref  : (B_pad, 1)       f32    per-split node counts (written once)
    acc_ref   : (B_pad, F)       f32    accumulator scratch (persists over tiles)
    cnt_ref   : (B_pad, 1)       f32    count accumulator scratch
    """
    t = pl.program_id(1)

    @pl.when(t == 0)
    def _init():
        acc_ref[...] = jnp.zeros_like(acc_ref)
        cnt_ref[...] = jnp.zeros_like(cnt_ref)

    b_pad = acc_ref.shape[0]
    seg = batch_ref[...]                                        # (1, TN)
    gid = jax.lax.broadcasted_iota(jnp.int32, (b_pad, 1), 0)    # (B_pad, 1)
    onehot = seg == gid                                         # (B_pad, TN)

    x = x_ref[...]
    if transposed:
        # x is (F, TN) with the node axis on lanes; tail already zero-padded
        # wrapper-side, so no masking is needed.  Contract over the node axis.
        contrib = jax.lax.dot_general(
            onehot.astype(x.dtype), x,
            dimension_numbers=(((1,), (1,)), ((), ())),
            preferred_element_type=jnp.float32)                 # (B_pad, F)
    else:
        # x is (TN, F) streamed straight from HBM without any wrapper copy.
        # Zero the ragged tail rows: garbage (possibly NaN) past N must not
        # reach the dot (0 * NaN = NaN in the f32 accumulation).
        base = (pl.program_id(0) * tiles_per_split + t) * tile_nodes
        row = base + jax.lax.broadcasted_iota(jnp.int32, (x.shape[0], 1), 0)
        x = jnp.where(row < num_nodes, x, jnp.zeros_like(x))
        contrib = jnp.dot(onehot.astype(x.dtype), x,
                          preferred_element_type=jnp.float32)   # (B_pad, F)

    acc_ref[...] += contrib
    # Count accumulation (free filler on the XLU slot; used only for 'mean').
    cnt_ref[...] += jnp.sum(onehot.astype(jnp.float32), axis=-1, keepdims=True)

    @pl.when(t == pl.num_programs(1) - 1)
    def _writeback():
        sums_ref[...] = acc_ref[...]
        cnts_ref[...] = cnt_ref[...]


def _combine_linear_kernel(sums_ref, cnts_ref, w_ref, b_ref, o_ref, *,
                           readout, n_splits, b_pad):
    """Combine per-split partials, apply exact mean and the linear layer."""
    pooled = sums_ref[pl.ds(0, b_pad), :]
    for s in range(1, n_splits):
        pooled = pooled + sums_ref[pl.ds(s * b_pad, b_pad), :]
    if readout == "mean":
        cnt = cnts_ref[pl.ds(0, b_pad), :]
        for s in range(1, n_splits):
            cnt = cnt + cnts_ref[pl.ds(s * b_pad, b_pad), :]
        pooled = pooled / jnp.maximum(cnt, 1.0)                  # exact mean
    out = jnp.dot(pooled, w_ref[...],
                  preferred_element_type=jnp.float32) + b_ref[...]
    o_ref[...] = out.astype(o_ref.dtype)                         # Identity act


def linear_trento_graph_predictor(node_x, batch, weight, bias, num_graphs,
                                  readout="mean", tile_nodes=None):
    """Pallas implementation of LinearTrentoGraphPredictor.forward.

    node_x : [N, F] float  node features
    batch  : [N]    int    graph assignment (values in [0, num_graphs))
    weight : [T, F] float  nn.Linear weight (PyTorch layout)
    bias   : [T]    float  nn.Linear bias
    Returns [num_graphs, T] float32.
    """
    assert readout in ("sum", "mean")
    N, F = node_x.shape
    T = weight.shape[0]
    B = int(num_graphs)                          # must be a static Python int

    B_pad = _round_up(max(B, 1), 8)
    T_pad = _round_up(max(T, 1), 128)
    F_lane = _round_up(F, 128)
    transposed = (F % 128) != 0                  # lane-dense stream for narrow F
    itemsize = node_x.dtype.itemsize

    # ---- generation-aware VMEM / tile budget (v5e/v6e: 128 MiB, v7x: 64) ----
    try:
        vmem_cap = int(pltpu.get_tpu_info().vmem_capacity_bytes)
    except Exception:
        vmem_cap = 64 << 20                      # conservative (v7x-sized)
    vmem_target = min(48 << 20, max(16 << 20, int(vmem_cap * 0.4)))

    resident = (2 * B_pad * F_lane * 4           # sums output block buffers
                + 2 * B_pad * 128 * 4            # cnts output block buffers
                + B_pad * F_lane * 4             # pooled-sum accumulator scratch
                + B_pad * 128 * 4)               # count accumulator scratch
    stream_budget = max(2 << 20, vmem_target - resident)

    # Bytes per streamed node row in VMEM (x double-buffered, batch ids padded
    # to 8 sublanes, one-hot / compare temporaries scale with B_pad).
    x_row_bytes = (_round_up(F, 8) if transposed else F_lane) * itemsize
    per_node_bytes = 2 * x_row_bytes + 2 * 8 * 4 + 4 * B_pad * 4
    if tile_nodes is None:
        tn = stream_budget // per_node_bytes
    else:
        tn = int(tile_nodes)
    tn = max(128, (tn // 128) * 128)
    tn = min(tn, _round_up(max(N, 1), 128))      # don't over-pad tiny N

    n_tiles = _cdiv(max(N, 1), tn)
    n_splits = 2 if n_tiles >= 2 else 1          # engages both TCs on v7x
    tiles_per_split = _cdiv(n_tiles, n_splits)
    N_pad = n_splits * tiles_per_split * tn

    # ---- inputs: pad ids (cheap); x streams without an extra HBM pass unless
    #      a lane-dense transpose is required for narrow F --------------------
    batch_p = jnp.full((1, N_pad), -1, jnp.int32).at[0, :N].set(
        batch.astype(jnp.int32))
    if transposed:
        x_in = jnp.zeros((F, N_pad), node_x.dtype).at[:, :N].set(node_x.T)
        x_spec = pl.BlockSpec((F, tn),
                              lambda s, t: (0, s * tiles_per_split + t))
    else:
        x_in = node_x                            # native dtype, no copy/pad
        x_spec = pl.BlockSpec((tn, F),
                              lambda s, t: (s * tiles_per_split + t, 0))

    need = resident + 2 * (tn * x_row_bytes + 8 * tn * 4) + 4 * B_pad * tn * 4
    vmem_limit = int(min(max(int(need * 1.5), 32 << 20), int(vmem_cap * 0.75)))
    vmem_limit = int(min(max(vmem_limit, need + (2 << 20)),
                         int(vmem_cap * 0.9)))

    pool_kernel = functools.partial(
        _segment_pool_kernel, transposed=transposed,
        tiles_per_split=tiles_per_split, tile_nodes=tn, num_nodes=N)

    part_sums, part_cnts = pl.pallas_call(
        pool_kernel,
        out_shape=(jax.ShapeDtypeStruct((n_splits * B_pad, F), jnp.float32),
                   jax.ShapeDtypeStruct((n_splits * B_pad, 1), jnp.float32)),
        grid=(n_splits, tiles_per_split),
        in_specs=[
            pl.BlockSpec((1, tn), lambda s, t: (0, s * tiles_per_split + t)),
            x_spec,
        ],
        out_specs=[
            pl.BlockSpec((B_pad, F), lambda s, t: (s, 0)),
            pl.BlockSpec((B_pad, 1), lambda s, t: (s, 0)),
        ],
        scratch_shapes=[
            pltpu.VMEM((B_pad, F), jnp.float32),     # pooled-sum accumulator
            pltpu.VMEM((B_pad, 1), jnp.float32),     # node-count accumulator
        ],
        compiler_params=pltpu.CompilerParams(
            dimension_semantics=("parallel", "arbitrary"),
            vmem_limit_bytes=vmem_limit),
    )(batch_p, x_in)

    # ---- tiny finalize: combine splits + exact mean + linear + bias --------
    w_p = jnp.zeros((F, T_pad), jnp.float32).at[:, :T].set(
        weight.T.astype(jnp.float32))
    b_p = jnp.zeros((1, T_pad), jnp.float32).at[0, :T].set(
        bias.astype(jnp.float32))

    fin_kernel = functools.partial(_combine_linear_kernel, readout=readout,
                                   n_splits=n_splits, b_pad=B_pad)
    out_padded = pl.pallas_call(
        fin_kernel,
        out_shape=jax.ShapeDtypeStruct((B_pad, T_pad), jnp.float32),
    )(part_sums, part_cnts, w_p, b_p)

    return out_padded[:B, :T]


def _reference(node_x, batch, weight, bias, num_graphs, readout):
    """Pure-JAX f32 reference matching the PyTorch module exactly."""
    pooled = jax.ops.segment_sum(node_x.astype(jnp.float32), batch,
                                 num_segments=num_graphs)
    if readout == "mean":
        counts = jax.ops.segment_sum(
            jnp.ones((node_x.shape[0],), jnp.float32), batch,
            num_segments=num_graphs)
        pooled = pooled / jnp.maximum(counts, 1.0)[:, None]
    return pooled @ weight.T + bias


if __name__ == "__main__":
    root_key = jax.random.PRNGKey(0)

    def run_case(name, N, F, T, B, readout, tile_nodes=None, salt=0):
        ks = jax.random.split(jax.random.fold_in(root_key, salt), 4)
        node_x = jax.random.normal(ks[0], (N, F), dtype=jnp.float32)
        # Deterministic, sorted node->graph assignment (like PyG batching).
        batch = jnp.sort(jax.random.randint(ks[1], (N,), 0, B)).astype(jnp.int32)
        bound = 1.0 / (F ** 0.5)
        weight = jax.random.uniform(ks[2], (T, F), minval=-bound, maxval=bound,
                                    dtype=jnp.float32)
        bias = jax.random.uniform(ks[3], (T,), minval=-bound, maxval=bound,
                                  dtype=jnp.float32)

        out = linear_trento_graph_predictor(node_x, batch, weight, bias, B,
                                            readout=readout,
                                            tile_nodes=tile_nodes)
        out = jax.block_until_ready(out)
        ref = _reference(node_x, batch, weight, bias, B, readout)
        assert out.shape == (B, T), f"{name}: bad shape {out.shape}"
        assert jnp.allclose(out, ref, atol=5e-3, rtol=5e-3), \
            f"{name}: mismatch vs reference"

    # 1) Narrow features (F<128): lane-dense transposed stream, mean readout.
    run_case("narrow-mean", N=32, F=16, T=8, B=4, readout="mean", salt=0)
    # 2) Lane-aligned features (F=128): direct native-dtype stream with the
    #    ragged tail masked in-kernel; sum readout; forced multi-tile + 2-way
    #    core split.
    run_case("wide-sum", N=200, F=128, T=5, B=3, readout="sum",
             tile_nodes=128, salt=1)
    # 3) Multi-tile + 2-way split on the transposed path, mean readout.
    run_case("narrow-multi", N=1000, F=16, T=8, B=6, readout="mean",
             tile_nodes=128, salt=2)

    print("KERNEL_OK")
</pallas_src>

<mosaic_0001>
module attributes {stable_mosaic.version = 11 : i64} {
  func.func @_segment_pool_kernel(%arg0: i32, %arg1: i32, %arg2: memref<1x128xi32, #tpu.memory_space<vmem>>, %arg3: memref<16x128xf32, #tpu.memory_space<vmem>>, %arg4: memref<8x16xf32, #tpu.memory_space<vmem>>, %arg5: memref<8x1xf32, #tpu.memory_space<vmem>>, %arg6: memref<8x16xf32, #tpu.memory_space<vmem>>, %arg7: memref<8x1xf32, #tpu.memory_space<vmem>>) attributes {dimension_semantics = [#tpu.dimension_semantics<parallel>, #tpu.dimension_semantics<arbitrary>], iteration_bounds = array<i64: 1, 1>, scalar_prefetch = 0 : i64, scratch_operands = 2 : i64, tpu.core_type = #tpu.core_type<tc>, window_params = [{transform_indices = @transform_0, window_bounds = array<i64: 1, 128>}, {transform_indices = @transform_1, window_bounds = array<i64: 16, 128>}, {transform_indices = @transform_2, window_bounds = array<i64: 8, 16>}, {transform_indices = @transform_3, window_bounds = array<i64: 8, 1>}]} {
    %c0_i32 = arith.constant 0 : i32
    %0 = arith.cmpi eq, %arg1, %c0_i32 : i32
    %1 = arith.extui %0 : i1 to i32
    %c0_i32_0 = arith.constant 0 : i32
    %2 = arith.cmpi ne, %1, %c0_i32_0 : i32
    scf.if %2 {
      %cst_15 = arith.constant 0.000000e+00 : f32
      %25 = vector.broadcast %cst_15 : f32 to vector<8x16xf32>
      %c0_16 = arith.constant 0 : index
      %c0_17 = arith.constant 0 : index
      %26 = vector.load %arg6[%c0_16, %c0_17] : memref<8x16xf32, #tpu.memory_space<vmem>>, vector<8x16xf32>
      tpu.vector_store %arg6[%c0_16, %c0_17], %25 {strides = array<i32>} : memref<8x16xf32, #tpu.memory_space<vmem>>, vector<8x16xf32>,
      %cst_18 = arith.constant 0.000000e+00 : f32
      %27 = vector.broadcast %cst_18 : f32 to vector<8x1xf32>
      %c0_19 = arith.constant 0 : index
      %c0_20 = arith.constant 0 : index
      %28 = vector.load %arg7[%c0_19, %c0_20] : memref<8x1xf32, #tpu.memory_space<vmem>>, vector<8x1xf32>
      tpu.vector_store %arg7[%c0_19, %c0_20], %27 {strides = array<i32>} : memref<8x1xf32, #tpu.memory_space<vmem>>, vector<8x1xf32>,
    } else {
    }
    %c0 = arith.constant 0 : index
    %c0_1 = arith.constant 0 : index
    %3 = vector.load %arg2[%c0, %c0_1] : memref<1x128xi32, #tpu.memory_space<vmem>>, vector<1x128xi32>
    %4 = tpu.iota {dimensions = array<i32: 0>} : vector<8x1xi32>
    %5 = vector.broadcast %3 : vector<1x128xi32> to vector<8x128xi32>
    %6 = vector.broadcast %4 : vector<8x1xi32> to vector<8x128xi32>
    %7 = arith.cmpi eq, %5, %6 : vector<8x128xi32>
    %c0_2 = arith.constant 0 : index
    %c0_3 = arith.constant 0 : index
    %8 = vector.load %arg3[%c0_2, %c0_3] : memref<16x128xf32, #tpu.memory_space<vmem>>, vector<16x128xf32>
    %9 = arith.extui %7 : vector<8x128xi1> to vector<8x128xi32>
    %10 = arith.sitofp %9 : vector<8x128xi32> to vector<8x128xf32>
    %cst = arith.constant dense<0.000000e+00> : vector<8x16xf32>
    %11 = tpu.matmul %10, %8, %cst {dimension_numbers = #tpu.dot_dimension_numbers<[1], [1], [0], [0], [0, 0, 1, 0], [], []>} : vector<8x128xf32>, vector<16x128xf32>, vector<8x16xf32> -> vector<8x16xf32>
    %c0_4 = arith.constant 0 : index
    %c0_5 = arith.constant 0 : index
    %12 = vector.load %arg6[%c0_4, %c0_5] : memref<8x16xf32, #tpu.memory_space<vmem>>, vector<8x16xf32>
    %13 = arith.addf %12, %11 : vector<8x16xf32>
    %c0_6 = arith.constant 0 : index
    %c0_7 = arith.constant 0 : index
    %14 = vector.load %arg6[%c0_6, %c0_7] : memref<8x16xf32, #tpu.memory_space<vmem>>, vector<8x16xf32>
    tpu.vector_store %arg6[%c0_6, %c0_7], %13 {strides = array<i32>} : memref<8x16xf32, #tpu.memory_space<vmem>>, vector<8x16xf32>,
    %c0_8 = arith.constant 0 : index
    %c0_9 = arith.constant 0 : index
    %15 = vector.load %arg7[%c0_8, %c0_9] : memref<8x1xf32, #tpu.memory_space<vmem>>, vector<8x1xf32>
    %16 = arith.extui %7 : vector<8x128xi1> to vector<8x128xi32>
    %17 = arith.sitofp %16 : vector<8x128xi32> to vector<8x128xf32>
    %cst_10 = arith.constant dense<0.000000e+00> : vector<8xf32>
    %18 = vector.multi_reduction <add>, %17, %cst_10 [1] : vector<8x128xf32> to vector<8xf32>
    %19 = vector.shape_cast %18 : vector<8xf32> to vector<8x1xf32>
    %20 = arith.addf %15, %19 : vector<8x1xf32>
    %c0_11 = arith.constant 0 : index
    %c0_12 = arith.constant 0 : index
    %21 = vector.load %arg7[%c0_11, %c0_12] : memref<8x1xf32, #tpu.memory_space<vmem>>, vector<8x1xf32>
    tpu.vector_store %arg7[%c0_11, %c0_12], %20 {strides = array<i32>} : memref<8x1xf32, #tpu.memory_space<vmem>>, vector<8x1xf32>,
    %c0_i32_13 = arith.constant 0 : i32
    %22 = arith.cmpi eq, %arg1, %c0_i32_13 : i32
    %23 = arith.extui %22 : i1 to i32
    %c0_i32_14 = arith.constant 0 : i32
    %24 = arith.cmpi ne, %23, %c0_i32_14 : i32
    scf.if %24 {
      %c0_15 = arith.constant 0 : index
      %c0_16 = arith.constant 0 : index
      %25 = vector.load %arg6[%c0_15, %c0_16] : memref<8x16xf32, #tpu.memory_space<vmem>>, vector<8x16xf32>
      %c0_17 = arith.constant 0 : index
      %c0_18 = arith.constant 0 : index
      %26 = vector.load %arg4[%c0_17, %c0_18] : memref<8x16xf32, #tpu.memory_space<vmem>>, vector<8x16xf32>
      tpu.vector_store %arg4[%c0_17, %c0_18], %25 {strides = array<i32>} : memref<8x16xf32, #tpu.memory_space<vmem>>, vector<8x16xf32>,
      %c0_19 = arith.constant 0 : index
      %c0_20 = arith.constant 0 : index
      %27 = vector.load %arg7[%c0_19, %c0_20] : memref<8x1xf32, #tpu.memory_space<vmem>>, vector<8x1xf32>
      %c0_21 = arith.constant 0 : index
      %c0_22 = arith.constant 0 : index
      %28 = vector.load %arg5[%c0_21, %c0_22] : memref<8x1xf32, #tpu.memory_space<vmem>>, vector<8x1xf32>
      tpu.vector_store %arg5[%c0_21, %c0_22], %27 {strides = array<i32>} : memref<8x1xf32, #tpu.memory_space<vmem>>, vector<8x1xf32>,
    } else {
    }
    return
  }
  func.func @transform_0(%arg0: i32, %arg1: i32) -> (i32, i32) {
    %c1_i32 = arith.constant 1 : i32
    %0 = arith.muli %arg0, %c1_i32 : i32
    %1 = arith.addi %0, %arg1 : i32
    %c0_i32 = arith.constant 0 : i32
    %c0_i32_0 = arith.constant 0 : i32
    return %c0_i32, %1 : i32, i32
  }
  func.func @transform_1(%arg0: i32, %arg1: i32) -> (i32, i32) {
    %c1_i32 = arith.constant 1 : i32
    %0 = arith.muli %arg0, %c1_i32 : i32
    %1 = arith.addi %0, %arg1 : i32
    %c0_i32 = arith.constant 0 : i32
    %c0_i32_0 = arith.constant 0 : i32
    return %c0_i32, %1 : i32, i32
  }
  func.func @transform_2(%arg0: i32, %arg1: i32) -> (i32, i32) {
    %c0_i32 = arith.constant 0 : i32
    %c0_i32_0 = arith.constant 0 : i32
    return %arg0, %c0_i32 : i32, i32
  }
  func.func @transform_3(%arg0: i32, %arg1: i32) -> (i32, i32) {
    %c0_i32 = arith.constant 0 : i32
    %c0_i32_0 = arith.constant 0 : i32
    return %arg0, %c0_i32 : i32, i32
  }
}

</mosaic_0001>

<llo_original>
// kernel: tpu_custom_call.1
$region0: #{tpu_custom_call.1}
  #allocation0 [shape = 'u32[]', space=smem, size = 0x4, offset = 0x4, fixed_abs, tag = 'smem constant byte address 0x4 - core index']
  #allocation1 [shape = 'u32[144,128]{1,0:T(1,128)}', space=vmem, size = 0x12000, scoped, tag = 'internal scratch']
  #allocation2 [shape = 'f32[8,16]{1,0:T(8,128)}', space=vmem, size = 0x1000, scoped, tag = 'scratch operand']
  #allocation3 [shape = 'f32[8,1]{1,0:T(8,128)}', space=vmem, size = 0x1000, scoped, tag = 'scratch operand']
  %s0 = inlined_call_operand.hbm [shape: s32[1,128], index: 0, kind: input, shape index: {}]
  %s1 = inlined_call_operand.hbm [shape: f32[16,128], index: 1, kind: input, shape index: {}]
  %s2 = inlined_call_operand.hbm [shape: f32[8,16], index: 2, kind: output, shape index: {0}]
  %s3 = inlined_call_operand.vmem [shape: f32[8,1], index: 3, kind: output, shape index: {1}]
  %4 = xla_tuple %s2, %s3
  %s5 = sld [smem:[#allocation0]]
  $region42: #{tpu_custom_call.1} parent=0
    _
  %s7 = ssub.s32 1, %s5
  %s8 = scalar_select 0, %s7, %s5
  $region1: #{tpu_custom_call.1} parent=0
    #allocation4 [shape = 'u8[512]{0}', space=vmem, size = 0x400, scoped, tag = 'input window, operand 0, single buffered']
    #allocation5 [shape = 's32[1]{0}', space=sflag, size = 0x4, scoped, tag = 'scoped memory for tpu_custom_call.1']
    #allocation6 [shape = 's32[1]{0}', space=sflag, size = 0x4, scoped, tag = 'scoped memory for tpu_custom_call.1']
    #allocation7 [shape = 'u8[8192]{0}', space=vmem, size = 0x2000, scoped, tag = 'input window, operand 1, single buffered']
    #allocation8 [shape = 's32[1]{0}', space=sflag, size = 0x4, scoped, tag = 'scoped memory for tpu_custom_call.1']
    #allocation9 [shape = 'u8[4096]{0}', space=vmem, size = 0x1000, scoped, tag = 'output window, operand 0, single buffered']
    %9 = vsyncpa [#allocation5], 0
    %10 = vsyncpa [#allocation8], 0
    %11 = vsyncpa [#allocation6], 0
    // Predicated region
    $region2: #{tpu_custom_call.1} parent=1 // pred_check
      _
    $region3: #{tpu_custom_call.1} parent=1 // pred_check_branch
      %13 = sbr.rel (0) target = $region5
    $region4: #{tpu_custom_call.1} parent=1 // pred_region
      %s14 = sadd.s32 0, 0
      %s16 = ssub.s32 16, 16
      %17 = vsyncadd [#allocation5], %s16
      %s18 = smul.addr %s14, 16
      %s19 = scalar_lea.hbm %s0, %s18
      %s21 = sshll.u32 [#allocation4], 4
      %s22 = int_to_ptr.vmem [resolvable:$true] %s21
      %24 = dma.hbm_to_vmem [thread:$0]  %s19, 16, %s22, [#allocation5]
    $region5: #{tpu_custom_call.1} parent=1 // pred_fallthru
      _
    // Predicated region
    $region6: #{tpu_custom_call.1} parent=1 // pred_check
      _
    $region7: #{tpu_custom_call.1} parent=1 // pred_check_branch
      %26 = sbr.rel (0) target = $region9
    $region8: #{tpu_custom_call.1} parent=1 // pred_region
      %s27 = sadd.s32 0, 0
      %s29 = ssub.s32 256, 256
      %30 = vsyncadd [#allocation8], %s29
      %s31 = smul.addr %s27, 128
      %s32 = scalar_lea.hbm %s1, %s31
      %s33 = sshll.u32 [#allocation7], 4
      %s34 = int_to_ptr.vmem [resolvable:$true] %s33
      %39 = dma.hbm_to_vmem [thread:$0]  %s32, 256, %s34, [#allocation8], 128, 128, 8
    $region9: #{tpu_custom_call.1} parent=1 // pred_fallthru
      _
    // Predicated region
    $region10: #{tpu_custom_call.1} parent=1 // pred_check
      _
    $region11: #{tpu_custom_call.1} parent=1 // pred_check_branch
      %41 = sbr.rel (0) target = $region13
    $region12: #{tpu_custom_call.1} parent=1 // pred_region
      %42 = dma.done [#allocation5], 16
    $region13: #{tpu_custom_call.1} parent=1 // pred_fallthru
      _
    // Predicated region
    $region14: #{tpu_custom_call.1} parent=1 // pred_check
      _
    $region15: #{tpu_custom_call.1} parent=1 // pred_check_branch
      %44 = sbr.rel (0) target = $region17
    $region16: #{tpu_custom_call.1} parent=1 // pred_region
      %45 = dma.done [#allocation8], 256
    $region17: #{tpu_custom_call.1} parent=1 // pred_fallthru
      _
    %s46 = sadd.s32 0, 0
    %s47 = sadd.s32 0, 0
    %p48 = scmp.eq.s32.totalorder 0, 0
    // Predicated region
    $region18: #{tpu_custom_call.1} parent=1 // pred_check
      %p49 = pneg %p48
    $region19: #{tpu_custom_call.1} parent=1 // pred_check_branch
      %51 = sbr.rel (%p49) target = $region21
    $region20: #{tpu_custom_call.1} parent=1 // pred_region
      %vm52 = vcmask 130048
      %53 = vst.msk [vmem:[#allocation2] sm:$0xff] %vm52, 0.0
      %vm54 = vcmask 7168
      %55 = vst.msk [vmem:[#allocation3] sm:$0xff] %vm54, 0.0
    $region21: #{tpu_custom_call.1} parent=1 // pred_fallthru
      _
    %v56 = vld [vmem:[#allocation4] sm:$0x1]
    %v57 = vlaneseq
    %v58 = vshrl.u32 %v57, 7
    %v59 = vlaneseq
    %v60 = vshrl.u32 %v59, 7
    %v61 = vsub.s32 0, %v60
    %v62 = vrot.slane %v56, %v61
    %vm63 = vcmp.eq.s32.totalorder %v62, %v58
    %v64 = vld [vmem:[#allocation7] sm:$0xff]
    %v65 = vld [vmem:[#allocation7 + $0x8] sm:$0xff]
    %v66 = vsel %vm63, 1, 0
    %v67 = vcvt.s32.f32 %v66
    %68 = vmatprep.subr.mxu0 0.0
    %69 = vmatpush1.xpose.msra.mxu0 0.0
    %70 = vmatprep.subr.mxu0 0.0
    %71 = vmatpush1.xpose.msra.mxu0 0.0
    %72 = vmatprep.subr.mxu0 0.0
    %73 = vmatpush1.xpose.msra.mxu0 0.0
    %74 = vmatprep.subr.mxu0 0.0
    %75 = vmatpush1.xpose.msra.mxu0 0.0
    %76 = vmatprep.subr.mxu0 0.0
    %77 = vmatpush1.xpose.msra.mxu0 0.0
    %78 = vmatprep.subr.mxu0 0.0
    %79 = vmatpush1.xpose.msra.mxu0 0.0
    %80 = vmatprep.subr.mxu0 0.0
    %81 = vmatpush1.xpose.msra.mxu0 0.0
    %82 = vmatprep.subr.mxu0 0.0
    %83 = vmatpush1.xpose.msra.mxu0 0.0
    %84 = vmatprep.subr.mxu0 0.0
    %85 = vmatpush1.xpose.msra.mxu0 0.0
    %86 = vmatprep.subr.mxu0 0.0
    %87 = vmatpush1.xpose.msra.mxu0 0.0
    %88 = vmatprep.subr.mxu0 0.0
    %89 = vmatpush1.xpose.msra.mxu0 0.0
    %90 = vmatprep.subr.mxu0 0.0
    %91 = vmatpush1.xpose.msra.mxu0 0.0
    %92 = vmatprep.subr.mxu0 0.0
    %93 = vmatpush1.xpose.msra.mxu0 0.0
    %94 = vmatprep.subr.mxu0 0.0
    %95 = vmatpush1.xpose.msra.mxu0 0.0
    %96 = vmatprep.subr.mxu0 0.0
    %97 = vmatpush1.xpose.msra.mxu0 %v65
    %98 = vmatprep.subr.mxu0 0.0
    %99 = vmatpush1.xpose.msra.mxu0 %v64
    %100 = vmatprep.subr.mxu0 0.0
    %101 = vmatpush2.xpose.msra.mxu0 0.0
    %102 = vmatprep.subr.mxu0 0.0
    %103 = vmatpush2.xpose.msra.mxu0 0.0
    %104 = vmatprep.subr.mxu0 0.0
    %105 = vmatpush2.xpose.msra.mxu0 0.0
    %106 = vmatprep.subr.mxu0 0.0
    %107 = vmatpush2.xpose.msra.mxu0 0.0
    %108 = vmatprep.subr.mxu0 0.0
    %109 = vmatpush2.xpose.msra.mxu0 0.0
    %110 = vmatprep.subr.mxu0 0.0
    %111 = vmatpush2.xpose.msra.mxu0 0.0
    %112 = vmatprep.subr.mxu0 0.0
    %113 = vmatpush2.xpose.msra.mxu0 0.0
    %114 = vmatprep.subr.mxu0 0.0
    %115 = vmatpush2.xpose.msra.mxu0 0.0
    %116 = vmatprep.subr.mxu0 0.0
    %117 = vmatpush2.xpose.msra.mxu0 0.0
    %118 = vmatprep.subr.mxu0 0.0
    %119 = vmatpush2.xpose.msra.mxu0 0.0
    %120 = vmatprep.subr.mxu0 0.0
    %121 = vmatpush2.xpose.msra.mxu0 0.0
    %122 = vmatprep.subr.mxu0 0.0
    %123 = vmatpush2.xpose.msra.mxu0 0.0
    %124 = vmatprep.subr.mxu0 0.0
    %125 = vmatpush2.xpose.msra.mxu0 0.0
    %126 = vmatprep.subr.mxu0 0.0
    %127 = vmatpush2.xpose.msra.mxu0 0.0
    %128 = vmatprep.subr.mxu0 0.0
    %129 = vmatpush2.xpose.msra.mxu0 0.0
    %130 = vmatprep.subr.mxu0 0.0
    %131 = vmatpush2.xpose.msra.mxu0 0.0
    %132 = vmatprep.mubr.f32.mxu0 0.0
    %133 = vmatmul.mubr.f32.gmra.mxu0 %v67
    %v134 = vpop.f32.mrf.mxu0
    %v135 = vadd.f32 0.0, %v134
    %v136 = vpop.f32.mrf.mxu0
    %137 = vdwg.mxu0
    %v138 = vld [vmem:[#allocation2] sm:$0xff]
    %v139 = vadd.f32 %v138, %v135
    %vm140 = vcmask 130048
    %141 = vst.msk [vmem:[#allocation2] sm:$0xff] %vm140, %v139
    %v142 = vld [vmem:[#allocation3] sm:$0xff]
    %143 = vadd.xlane.f32.xlu0 %v67
    %v144 = vpop.xlane.xlu0 %143
    %v145 = vadd.f32 %v142, %v144
    %vm146 = vcmask 7168
    %147 = vst.msk [vmem:[#allocation3] sm:$0xff] %vm146, %v145
    // Predicated region
    $region22: #{tpu_custom_call.1} parent=1 // pred_check
      %p148 = pneg %p48
    $region23: #{tpu_custom_call.1} parent=1 // pred_check_branch
      %150 = sbr.rel (%p148) target = $region25
    $region24: #{tpu_custom_call.1} parent=1 // pred_region
      %v151 = vld [vmem:[#allocation2] sm:$0xff]
      %152 = vst.msk [vmem:[#allocation9] sm:$0xff] %vm140, %v151
      %v153 = vld [vmem:[#allocation3] sm:$0xff]
      %154 = vst.msk [vmem:[%s3] sm:$0xff] %vm146, %v153
    $region25: #{tpu_custom_call.1} parent=1 // pred_fallthru
      _
    // Predicated region
    $region26: #{tpu_custom_call.1} parent=1 // pred_check
      _
    $region27: #{tpu_custom_call.1} parent=1 // pred_check_branch
      %156 = sbr.rel (0) target = $region29
    $region28: #{tpu_custom_call.1} parent=1 // pred_region
      %s158 = ssub.s32 128, 128
      %159 = vsyncadd [#allocation6], %s158
      %s161 = sshll.u32 [#allocation9], 4
      %s162 = int_to_ptr.vmem [resolvable:$true] %s161
      %164 = dma.vmem_to_hbm [thread:$0]  %s162, 128, %s2, [#allocation6]
    $region29: #{tpu_custom_call.1} parent=1 // pred_fallthru
      _
    // Predicated region
    $region30: #{tpu_custom_call.1} parent=1 // pred_check
      _
    $region31: #{tpu_custom_call.1} parent=1 // pred_check_branch
      %166 = sbr.rel (0) target = $region33
    $region32: #{tpu_custom_call.1} parent=1 // pred_region
      _
    $region33: #{tpu_custom_call.1} parent=1 // pred_fallthru
      _
    // Predicated region
    $region34: #{tpu_custom_call.1} parent=1 // pred_check
      _
    $region35: #{tpu_custom_call.1} parent=1 // pred_check_branch
      %168 = sbr.rel (0) target = $region37
    $region36: #{tpu_custom_call.1} parent=1 // pred_region
      %169 = dma.done [#allocation6], 128
    $region37: #{tpu_custom_call.1} parent=1 // pred_fallthru
      _
    // Predicated region
    $region38: #{tpu_custom_call.1} parent=1 // pred_check
      _
    $region39: #{tpu_custom_call.1} parent=1 // pred_check_branch
      %171 = sbr.rel (0) target = $region41
    $region40: #{tpu_custom_call.1} parent=1 // pred_region
      _
    $region41: #{tpu_custom_call.1} parent=1 // pred_fallthru
      _
    %172 = vsyncpa [#allocation5], 1
    %173 = vsyncpa [#allocation8], 1
    %174 = vsyncpa [#allocation6], 1

</llo_original>
